<compile_context>
chip_gen: v7x
topology: tpu7x:2x2x1
jax: 0.10.0
libtpu: 0.0.40
codegen_flags: <defaults>
</compile_context>

<pallas_src>
import functools

import numpy as np

import jax
import jax.numpy as jnp
from jax.experimental import pallas as pl
from jax.experimental.pallas import tpu as pltpu


def _vmem(n):
    return [pl.BlockSpec(memory_space=pltpu.MemorySpace.VMEM) for _ in range(n)]


# ------------------- host-built selection matrices / masks -------------------

def _build_constants(B, s):
    """Upsample-x2 + zero-pad selection matrices and interior masks.

    Flat padded layout: row r = b*Wp*Wp + hp*Wp + wp, hp/wp in [0, Wp);
    the image interior is 1 <= hp, wp <= H.
    """
    H1, H2 = 2 * s, 4 * s
    Wp1, Wp2 = H1 + 2, H2 + 2
    R1, R2 = B * Wp1 * Wp1, B * Wp2 * Wp2

    # S1: (R1, s*s*B) : padded/upsampled row  <-  low-res slab row (p*B + b)
    S1 = np.zeros((R1, s * s * B), np.float32)
    for b in range(B):
        for hp in range(1, H1 + 1):
            for wp in range(1, H1 + 1):
                r = b * Wp1 * Wp1 + hp * Wp1 + wp
                h0, w0 = (hp - 1) // 2, (wp - 1) // 2
                S1[r, (h0 * s + w0) * B + b] = 1.0

    # S2: (R2, R1) : padded/upsampled row  <-  full-R1 block-1 output row
    S2 = np.zeros((R2, R1), np.float32)
    for b in range(B):
        for hp in range(1, H2 + 1):
            for wp in range(1, H2 + 1):
                r = b * Wp2 * Wp2 + hp * Wp2 + wp
                h1, w1 = (hp - 1) // 2 + 1, (wp - 1) // 2 + 1
                S2[r, b * Wp1 * Wp1 + h1 * Wp1 + w1] = 1.0

    def interior(Wp, H, R):
        m = np.zeros((R, 1), np.float32)
        for b in range(B):
            for hp in range(1, H + 1):
                for wp in range(1, H + 1):
                    m[b * Wp * Wp + hp * Wp + wp, 0] = 1.0
        return m

    masks = np.zeros((R2, 2), np.float32)
    masks[:R1, 0:1] = interior(Wp1, H1, R1)
    masks[:, 1:2] = interior(Wp2, H2, R2)
    return S1, S2, masks


# ------------------------------ fused kernel ---------------------------------

def _generator_kernel(x_ref, w1_ref, b1_ref, vec_ref, s1_ref, s2_ref,
                      mask_ref, wc_ref, o_ref, acc_ref, *, s, B, roll_like_jnp):
    f32, bf16 = jnp.float32, jnp.bfloat16
    H1, H2 = 2 * s, 4 * s
    Wp1, Wp2 = H1 + 2, H2 + 2
    R1, R2 = B * Wp1 * Wp1, B * Wp2 * Wp2

    # ---- Linear: h = (label_emb * noise) @ W + b ---------------------------
    h = jnp.dot(x_ref[...], w1_ref[...], preferred_element_type=f32) + b1_ref[...]

    # (B, s*s*128) -> (s*s*B, 128) channel-last slab (row = p*B + b);
    # lane slices are 128-aligned.
    slab0 = jnp.concatenate([h[:, p * 128:(p + 1) * 128] for p in range(s * s)],
                            axis=0)

    # ---- BatchNorm2d(128, eps=1e-5), training (batch) statistics ----------
    n0 = float(s * s * B)
    mu0 = jnp.sum(slab0, axis=0, keepdims=True) / n0
    var0 = jnp.maximum(
        jnp.sum(slab0 * slab0, axis=0, keepdims=True) / n0 - mu0 * mu0, 0.0)
    slab0 = ((slab0 - mu0) * jax.lax.rsqrt(var0 + 1e-5) * vec_ref[0:1, :]
             + vec_ref[1:2, :])

    # ---- Upsample x2 (nearest) + zero-pad: one bf16 selection matmul ------
    u1 = jnp.dot(s1_ref[...], slab0.astype(bf16), preferred_element_type=f32)

    def conv3x3(u, layer, bias, Wp, R):
        """3x3 'same' conv over the full padded flat slab u (R, 128).

        Tap shifts use sublane rolls of the whole (8-row-aligned) slab; the
        wrapped / cross-image rows only land on non-interior rows, which the
        caller masks out of the BN stats.  Accumulation chains into the f32
        VMEM scratch (MRB-friendly on v7x).
        """
        taps = [(kh, kw) for kh in range(3) for kw in range(3)]
        for t, (kh, kw) in enumerate(taps):
            d = (kh - 1) * Wp + (kw - 1)
            if d == 0:
                patch = u
            else:
                shift = (-d) % R if roll_like_jnp else d % R
                patch = pltpu.roll(u, shift, axis=0)
            z = jnp.dot(patch.astype(bf16), wc_ref[layer, kh, kw],
                        preferred_element_type=f32)
            if t == 0:
                acc_ref[0:R, :] = z + bias
            else:
                acc_ref[0:R, :] += z
        return acc_ref[0:R, :]

    def bn_lrelu(a, mask, n_int, g, b, eps):
        # masked single-pass batch stats (pad rows excluded), biased variance.
        m = a * mask
        mu = jnp.sum(m, axis=0, keepdims=True) / n_int
        var = jnp.maximum(
            jnp.sum(m * a, axis=0, keepdims=True) / n_int - mu * mu, 0.0)
        y = (a - mu) * jax.lax.rsqrt(var + eps) * g + b
        y = jnp.where(y > 0, y, 0.2 * y)                     # LeakyReLU(0.2)
        return y * mask                                      # restore zero halo

    m1 = mask_ref[0:R1, 0:1]
    m2 = mask_ref[:, 1:2]

    # ---- block 1: Conv(128->128) -> BN(eps=0.8) -> LReLU ------------------
    a1 = conv3x3(u1, 0, vec_ref[2:3, :], Wp1, R1)
    y1 = bn_lrelu(a1, m1, float(B * H1 * H1), vec_ref[3:4, :], vec_ref[4:5, :], 0.8)

    # ---- Upsample x2 + pad, Conv(128->128 [64 real]) -> BN -> LReLU -------
    u2 = jnp.dot(s2_ref[...], y1.astype(bf16), preferred_element_type=f32)
    a2 = conv3x3(u2, 1, vec_ref[5:6, :], Wp2, R2)
    y2 = bn_lrelu(a2, m2, float(B * H2 * H2), vec_ref[6:7, :], vec_ref[7:8, :], 0.8)

    # ---- Conv(128 [64 real] -> 128 [C real]) -> Tanh, lane-dense store ----
    a3 = conv3x3(y2, 2, vec_ref[8:9, :], Wp2, R2)
    o_ref[...] = jnp.tanh(a3)


# --------------------------------- wrapper -----------------------------------

def generator_forward(params, noise, labels, *, img_size, channels,
                      roll_like_jnp=True):
    s = img_size // 4
    B = noise.shape[0]
    H2 = 4 * s
    Wp2 = H2 + 2
    R2 = B * Wp2 * Wp2

    S1, S2, masks = _build_constants(B, s)          # trace-time constants

    x = jnp.take(params["label_emb"], labels, axis=0) * noise    # [B, latent]

    # conv weights (HWIO): Cout (and conv3 Cin) zero-padded to lane-dense 128,
    # stacked into one bf16 operand (f32 accumulation happens in-kernel).
    wc2 = jnp.zeros((3, 3, 128, 128), jnp.float32).at[..., :64].set(params["conv2_w"])
    wc3 = (jnp.zeros((3, 3, 128, 128), jnp.float32)
           .at[:, :, :64, :channels].set(params["conv3_w"]))
    wc = jnp.stack([params["conv1_w"], wc2, wc3]).astype(jnp.bfloat16)

    def pad128(v, fill=0.0):
        return jnp.full((1, 128), fill, jnp.float32).at[:, :v.shape[-1]].set(v)

    vecs = jnp.concatenate([
        params["bn1_g"], params["bn1_b"],                        # 0, 1
        params["conv1_b"], params["bn2_g"], params["bn2_b"],     # 2, 3, 4
        pad128(params["conv2_b"]),                               # 5
        pad128(params["bn3_g"], 1.0), pad128(params["bn3_b"]),   # 6, 7
        pad128(params["conv3_b"]),                               # 8
    ], axis=0)

    out_slab = pl.pallas_call(
        functools.partial(_generator_kernel, s=s, B=B,
                          roll_like_jnp=roll_like_jnp),
        out_shape=jax.ShapeDtypeStruct((R2, 128), jnp.float32),
        in_specs=_vmem(8),
        out_specs=pl.BlockSpec(memory_space=pltpu.MemorySpace.VMEM),
        scratch_shapes=[pltpu.VMEM((R2, 128), jnp.float32)],
        compiler_params=pltpu.CompilerParams(vmem_limit_bytes=16 * 1024 * 1024),
    )(x, params["l1_w_p"], params["l1_b_p"], vecs,
      jnp.asarray(S1, jnp.bfloat16), jnp.asarray(S2, jnp.bfloat16),
      jnp.asarray(masks), wc)

    # Cheap XLA epilogue on a tiny tensor: NHWC view, drop pad + dummy
    # channels, NCHW.
    img = out_slab.reshape(B, Wp2, Wp2, 128)[:, 1:1 + H2, 1:1 + H2, :channels]
    return jnp.transpose(img, (0, 3, 1, 2))


# ------------------- one-time pltpu.roll direction probe ---------------------

def _roll_matches_jnp():
    """Pin the hardware rotate direction so tap shifts are convention-free."""
    def k(x_ref, o_ref):
        o_ref[...] = pltpu.roll(x_ref[...], 1, axis=0)

    x = jnp.arange(8 * 128, dtype=jnp.float32).reshape(8, 128)
    y = pl.pallas_call(
        k, out_shape=jax.ShapeDtypeStruct((8, 128), jnp.float32),
        in_specs=_vmem(1),
        out_specs=pl.BlockSpec(memory_space=pltpu.MemorySpace.VMEM),
    )(x)
    if bool(jnp.array_equal(y, jnp.roll(x, 1, axis=0))):
        return True
    assert bool(jnp.array_equal(y, jnp.roll(x, -1, axis=0))), \
        "unexpected pltpu.roll semantics"
    return False


# ----------------------- deterministic parameter init ------------------------

def init_params(key, img_size, channels, latent_dim, num_classes):
    init_size = img_size // 4
    ks = jax.random.split(key, 9)

    def u(k, shape, fan_in):
        bound = 1.0 / float(fan_in) ** 0.5
        return jax.random.uniform(k, shape, jnp.float32, -bound, bound)

    l1_w = u(ks[1], (latent_dim, 128 * init_size ** 2), latent_dim)
    l1_b = u(ks[2], (1, 128 * init_size ** 2), latent_dim)

    p = {
        "label_emb": jax.random.normal(ks[0], (num_classes, latent_dim), jnp.float32),
        "l1_w": l1_w,
        "l1_b": l1_b,
        # columns permuted (c,h,w)-major -> (h,w,c)-major so the kernel's
        # linear emits a channel-last slab directly (one-time init transform).
        "l1_w_p": jnp.transpose(l1_w.reshape(latent_dim, 128, init_size, init_size),
                                (0, 2, 3, 1)).reshape(latent_dim, init_size ** 2 * 128),
        "l1_b_p": jnp.transpose(l1_b.reshape(1, 128, init_size, init_size),
                                (0, 2, 3, 1)).reshape(1, init_size ** 2 * 128),
        "conv1_w": u(ks[3], (3, 3, 128, 128), 128 * 9),   # HWIO
        "conv1_b": u(ks[4], (1, 128), 128 * 9),
        "conv2_w": u(ks[5], (3, 3, 128, 64), 128 * 9),
        "conv2_b": u(ks[6], (1, 64), 128 * 9),
        "conv3_w": u(ks[7], (3, 3, 64, channels), 64 * 9),
        "conv3_b": u(ks[8], (1, channels), 64 * 9),
    }
    for name, c in (("bn1", 128), ("bn2", 128), ("bn3", 64)):  # PyTorch defaults
        p[name + "_g"] = jnp.ones((1, c), jnp.float32)
        p[name + "_b"] = jnp.zeros((1, c), jnp.float32)
    return p


# ----------------------------- pure-JAX reference ----------------------------

def reference_forward(params, noise, labels, img_size, channels):
    init_size = img_size // 4
    x = params["label_emb"][labels] * noise
    out = (x @ params["l1_w"] + params["l1_b"]).reshape(-1, 128, init_size, init_size)

    def bn(h, g, b, eps):
        mean = h.mean(axis=(0, 2, 3), keepdims=True)
        var = h.var(axis=(0, 2, 3), keepdims=True)
        return (h - mean) / jnp.sqrt(var + eps) * g.reshape(1, -1, 1, 1) + b.reshape(1, -1, 1, 1)

    def up(h):
        return jnp.repeat(jnp.repeat(h, 2, axis=2), 2, axis=3)

    def conv(h, w_hwio, b):
        y = jax.lax.conv_general_dilated(h, w_hwio, (1, 1), ((1, 1), (1, 1)),
                                         dimension_numbers=("NCHW", "HWIO", "NCHW"))
        return y + b.reshape(1, -1, 1, 1)

    lrelu = lambda h: jnp.where(h > 0, h, 0.2 * h)

    h = up(bn(out, params["bn1_g"], params["bn1_b"], 1e-5))
    h = lrelu(bn(conv(h, params["conv1_w"], params["conv1_b"]),
                 params["bn2_g"], params["bn2_b"], 0.8))
    h = up(h)
    h = lrelu(bn(conv(h, params["conv2_w"], params["conv2_b"]),
                 params["bn3_g"], params["bn3_b"], 0.8))
    return jnp.tanh(conv(h, params["conv3_w"], params["conv3_b"]))


# ----------------------------------- main ------------------------------------

if __name__ == "__main__":
    img_size, channels, latent_dim, num_classes, batch = 16, 3, 32, 10, 2

    key = jax.random.PRNGKey(0)
    kp, kn, kl = jax.random.split(key, 3)
    params = init_params(kp, img_size, channels, latent_dim, num_classes)
    noise = jax.random.normal(kn, (batch, latent_dim), jnp.float32)
    labels = jax.random.randint(kl, (batch,), 0, num_classes)

    fwd = jax.jit(functools.partial(generator_forward, img_size=img_size,
                                    channels=channels,
                                    roll_like_jnp=_roll_matches_jnp()))
    img = fwd(params, noise, labels)
    jax.block_until_ready(img)

    ref = reference_forward(params, noise, labels, img_size, channels)
    assert img.shape == (batch, channels, img_size, img_size)
    assert bool(jnp.all(jnp.isfinite(img)))
    err = jnp.abs(img - ref)
    # bf16 MXU operands (f32 accumulation) vs f32 reference: loose-but-meaningful gate.
    assert float(jnp.max(err)) < 6e-2
    assert float(jnp.mean(err)) < 1e-2

    print("KERNEL_OK")
</pallas_src>

<mosaic_0001>
module attributes {stable_mosaic.version = 11 : i64} {
  func.func @k(%arg0: memref<8x128xf32, #tpu.memory_space<vmem>>, %arg1: memref<8x128xf32, #tpu.memory_space<vmem>>) attributes {dimension_semantics = [], scalar_prefetch = 0 : i64, scratch_operands = 0 : i64, tpu.core_type = #tpu.core_type<tc>} {
    %c0 = arith.constant 0 : index
    %c0_0 = arith.constant 0 : index
    %0 = vector.load %arg0[%c0, %c0_0] : memref<8x128xf32, #tpu.memory_space<vmem>>, vector<8x128xf32>
    %c1_i32 = arith.constant 1 : i32
    %1 = tpu.dynamic_rotate %0 by %c1_i32 dim 0 : vector<8x128xf32>, i32 -> vector<8x128xf32>
    %c0_1 = arith.constant 0 : index
    %c0_2 = arith.constant 0 : index
    %2 = vector.load %arg1[%c0_1, %c0_2] : memref<8x128xf32, #tpu.memory_space<vmem>>, vector<8x128xf32>
    tpu.vector_store %arg1[%c0_1, %c0_2], %1 {strides = array<i32>} : memref<8x128xf32, #tpu.memory_space<vmem>>, vector<8x128xf32>,
    return
  }
}

</mosaic_0001>

<llo_original>
// kernel: tpu_custom_call.1
$region0: #{tpu_custom_call.1}
  #allocation0 [shape = 'u32[]', space=smem, size = 0x4, offset = 0x4, fixed_abs, tag = 'smem constant byte address 0x4 - core index']
  #allocation1 [shape = 'u32[144,128]{1,0:T(1,128)}', space=vmem, size = 0x12000, scoped, tag = 'internal scratch']
  %s0 = inlined_call_operand.hbm [shape: f32[8,128], index: 0, kind: input, shape index: {}]
  %s1 = inlined_call_operand.hbm [shape: f32[8,128], index: 1, kind: output, shape index: {}]
  %s2 = sld [smem:[#allocation0]]
  $region18: #{tpu_custom_call.1} parent=0
    _
  %s4 = ssub.s32 1, %s2
  %s5 = scalar_select 0, %s4, %s2
  $region1: #{tpu_custom_call.1} parent=0
    #allocation2 [shape = 'u8[4096]{0}', space=vmem, size = 0x1000, scoped, tag = 'input window, operand 0, single buffered']
    #allocation3 [shape = 's32[1]{0}', space=sflag, size = 0x4, scoped, tag = 'scoped memory for tpu_custom_call.1']
    #allocation4 [shape = 's32[1]{0}', space=sflag, size = 0x4, scoped, tag = 'scoped memory for tpu_custom_call.1']
    #allocation5 [shape = 'u8[4096]{0}', space=vmem, size = 0x1000, scoped, tag = 'output window, operand 0, single buffered']
    %6 = vsyncpa [#allocation3], 0
    %7 = vsyncpa [#allocation4], 0
    // Predicated region
    $region2: #{tpu_custom_call.1} parent=1 // pred_check
      _
    $region3: #{tpu_custom_call.1} parent=1 // pred_check_branch
      %9 = sbr.rel (0) target = $region5
    $region4: #{tpu_custom_call.1} parent=1 // pred_region
      %s11 = ssub.s32 128, 128
      %12 = vsyncadd [#allocation3], %s11
      %s14 = sshll.u32 [#allocation2], 4
      %s15 = int_to_ptr.vmem [resolvable:$true] %s14
      %17 = dma.hbm_to_vmem [thread:$0]  %s0, 128, %s15, [#allocation3]
    $region5: #{tpu_custom_call.1} parent=1 // pred_fallthru
      _
    // Predicated region
    $region6: #{tpu_custom_call.1} parent=1 // pred_check
      _
    $region7: #{tpu_custom_call.1} parent=1 // pred_check_branch
      %19 = sbr.rel (0) target = $region9
    $region8: #{tpu_custom_call.1} parent=1 // pred_region
      %20 = dma.done [#allocation3], 128
    $region9: #{tpu_custom_call.1} parent=1 // pred_fallthru
      _
    %v21 = vld [vmem:[#allocation2] sm:$0xff]
    %v22 = vrot.slane %v21, 7
    %23 = vst [vmem:[#allocation5] sm:$0xff] %v22
    // Predicated region
    $region10: #{tpu_custom_call.1} parent=1 // pred_check
      _
    $region11: #{tpu_custom_call.1} parent=1 // pred_check_branch
      %25 = sbr.rel (0) target = $region13
    $region12: #{tpu_custom_call.1} parent=1 // pred_region
      %s27 = ssub.s32 128, 128
      %28 = vsyncadd [#allocation4], %s27
      %s30 = sshll.u32 [#allocation5], 4
      %s31 = int_to_ptr.vmem [resolvable:$true] %s30
      %33 = dma.vmem_to_hbm [thread:$0]  %s31, 128, %s1, [#allocation4]
    $region13: #{tpu_custom_call.1} parent=1 // pred_fallthru
      _
    // Predicated region
    $region14: #{tpu_custom_call.1} parent=1 // pred_check
      _
    $region15: #{tpu_custom_call.1} parent=1 // pred_check_branch
      %35 = sbr.rel (0) target = $region17
    $region16: #{tpu_custom_call.1} parent=1 // pred_region
      %36 = dma.done [#allocation4], 128
    $region17: #{tpu_custom_call.1} parent=1 // pred_fallthru
      _
    %37 = vsyncpa [#allocation3], 1
    %38 = vsyncpa [#allocation4], 1

</llo_original>
